<compile_context>
chip_gen: v7x
topology: tpu7x:2x2x1
jax: 0.10.0
libtpu: 0.0.40
codegen_flags: <defaults>
</compile_context>

<pallas_src>
import functools

import jax
import jax.numpy as jnp
from jax import lax
from jax.experimental import pallas as pl
from jax.experimental.pallas import tpu as pltpu


def _round_up(a, b):
    return (a + b - 1) // b * b


# ---------------------------------------------------------------------------
# conv path:  Conv1d(C, C, k=2, stride=2, bias=False) + LeakyReLU(0.01)
# ---------------------------------------------------------------------------
def _conv_ds_kernel(x_ref, w_ref, o_ref, *, slope):
    # x_ref: (TM, G*2C)   w_ref: (G*2C, G*C) block-diagonal   o_ref: (TM, G*C)
    y = jnp.dot(x_ref[...], w_ref[...], preferred_element_type=jnp.float32)
    y = jnp.where(y > 0, y, slope * y)            # LeakyReLU fused in the tile
    o_ref[...] = y.astype(o_ref.dtype)


def downsample_conv(x, w, *, slope=0.01, channels_last=False):
    """x: (B, C, L) NCL (or (B, L, C) if channels_last); w: (C, C, 2) PyTorch OIW."""
    if channels_last:
        B, L, C = x.shape
    else:
        B, C, L = x.shape
    assert w.shape == (C, C, 2), w.shape
    Lout = L // 2

    if channels_last:
        x_nlc = x[:, :2 * Lout, :]
    else:
        x_nlc = jnp.transpose(x[:, :, :2 * Lout], (0, 2, 1))     # (B, 2*Lout, C)

    # (b, t, k, ci) -> row (b*Lout + t), col (k*C + ci): every output position's
    # receptive field sits in its own contiguous 2C-wide slot (free reshape).
    xp = x_nlc.reshape(B * Lout, 2 * C)

    # Lane folding: pack G output positions per row so tiles are lane-dense.
    G = 1 if C >= 128 else max(1, 128 // C)
    Kw, Nw = G * 2 * C, G * C
    N2 = B * Lout
    n_fold = pl.cdiv(N2, G)
    TM = 512 if n_fold >= 512 else _round_up(n_fold, 8)
    n_pad = _round_up(n_fold, TM)
    xp = jnp.pad(xp, ((0, n_pad * G - N2), (0, 0)))
    x_fold = xp.reshape(n_pad, Kw)

    # (C, C, 2) -> (2C, C) with rows ordered (k, ci), then block-diagonal (Kw, Nw)
    w_st = jnp.transpose(w, (2, 1, 0)).reshape(2 * C, C)
    w_bd = jnp.kron(jnp.eye(G, dtype=w.dtype), w_st)

    y_fold = pl.pallas_call(
        functools.partial(_conv_ds_kernel, slope=slope),
        out_shape=jax.ShapeDtypeStruct((n_pad, Nw), x.dtype),
        grid=(n_pad // TM,),
        in_specs=[pl.BlockSpec((TM, Kw), lambda i: (i, 0)),
                  pl.BlockSpec((Kw, Nw), lambda i: (0, 0))],     # resident weight
        out_specs=pl.BlockSpec((TM, Nw), lambda i: (i, 0)),
        compiler_params=pltpu.CompilerParams(
            dimension_semantics=("parallel",),
            vmem_limit_bytes=32 * 1024 * 1024),
    )(x_fold, w_bd)

    y = y_fold.reshape(n_pad * G, C)[:N2].reshape(B, Lout, C)
    if channels_last:
        return y
    return jnp.transpose(y, (0, 2, 1))


# ---------------------------------------------------------------------------
# maxPool path:  MaxPool1d(kernel_size=2, stride=2)   (secondary, simple kernel)
# ---------------------------------------------------------------------------
def _maxpool_ds_kernel(x_ref, o_ref):
    # x_ref: (TR, 2) adjacent-sample pairs -> o_ref: (TR, 1)
    o_ref[...] = jnp.max(x_ref[...], axis=1, keepdims=True)


def downsample_maxpool(x):
    """x: (B, C, L) NCL -> (B, C, L//2)."""
    B, C, L = x.shape
    Lout = L // 2
    xf = x[:, :, :2 * Lout].reshape(B * C * Lout, 2)     # free reshape: pairs
    M = xf.shape[0]
    TR = 2048 if M >= 2048 else _round_up(M, 8)
    Mpad = _round_up(M, TR)
    xf = jnp.pad(xf, ((0, Mpad - M), (0, 0)))
    out = pl.pallas_call(
        _maxpool_ds_kernel,
        out_shape=jax.ShapeDtypeStruct((Mpad, 1), x.dtype),
        grid=(Mpad // TR,),
        in_specs=[pl.BlockSpec((TR, 2), lambda i: (i, 0))],
        out_specs=pl.BlockSpec((TR, 1), lambda i: (i, 0)),
        compiler_params=pltpu.CompilerParams(
            dimension_semantics=("parallel",),
            vmem_limit_bytes=32 * 1024 * 1024),
    )(xf)
    return out[:M, 0].reshape(B, C, Lout)


# ---------------------------------------------------------------------------
# pure-JAX reference for correctness checking
# ---------------------------------------------------------------------------
def _reference_forward(x, w=None, model="conv", slope=0.01):
    B, C, L = x.shape
    Lout = L // 2
    if model == "conv":
        y = lax.conv_general_dilated(
            x, w, window_strides=(2,), padding="VALID",
            dimension_numbers=("NCH", "OIH", "NCH"),
            precision=lax.Precision.HIGHEST)
        return jnp.where(y > 0, y, slope * y)
    return jnp.max(x[:, :, :2 * Lout].reshape(B, C, Lout, 2), axis=-1)


if __name__ == "__main__":
    key = jax.random.PRNGKey(0)
    kx, kw, kx2, kw2 = jax.random.split(key, 4)

    # small shapes consistent with the module: (batch, channel, length)
    B, C, L = 2, 4, 16
    x = jax.random.normal(kx, (B, C, L), dtype=jnp.float32)
    w = jax.random.normal(kw, (C, C, 2), dtype=jnp.float32) * 0.3

    out = jax.block_until_ready(downsample_conv(x, w))
    ref = _reference_forward(x, w, model="conv")
    assert out.shape == (B, C, L // 2), out.shape
    assert jnp.allclose(out, ref, rtol=1e-3, atol=1e-3), float(
        jnp.max(jnp.abs(out - ref)))

    # maxPool variant
    out_mp = jax.block_until_ready(downsample_maxpool(x))
    ref_mp = _reference_forward(x, model="maxPool")
    assert out_mp.shape == (B, C, L // 2), out_mp.shape
    assert jnp.allclose(out_mp, ref_mp), float(jnp.max(jnp.abs(out_mp - ref_mp)))

    # larger shape: exercises the row-tile grid (>1 pipelined step)
    B2, C2, L2 = 8, 8, 4096
    x2 = jax.random.normal(kx2, (B2, C2, L2), dtype=jnp.float32)
    w2 = jax.random.normal(kw2, (C2, C2, 2), dtype=jnp.float32) * 0.2
    out2 = jax.block_until_ready(downsample_conv(x2, w2))
    ref2 = _reference_forward(x2, w2, model="conv")
    assert out2.shape == (B2, C2, L2 // 2), out2.shape
    assert jnp.allclose(out2, ref2, rtol=1e-3, atol=1e-3), float(
        jnp.max(jnp.abs(out2 - ref2)))

    print("KERNEL_OK")
</pallas_src>

<mosaic_0001>
module attributes {stable_mosaic.version = 11 : i64} {
  func.func @_conv_ds_kernel(%arg0: i32, %arg1: memref<8x256xf32, #tpu.memory_space<vmem>>, %arg2: memref<256x128xf32, #tpu.memory_space<vmem>>, %arg3: memref<8x128xf32, #tpu.memory_space<vmem>>) attributes {dimension_semantics = [#tpu.dimension_semantics<parallel>], iteration_bounds = array<i64: 1>, scalar_prefetch = 0 : i64, scratch_operands = 0 : i64, tpu.core_type = #tpu.core_type<tc>, window_params = [{transform_indices = @transform_0, window_bounds = array<i64: 8, 256>}, {pipeline_mode = #tpu.pipeline_mode<synchronous>, transform_indices = @transform_1, window_bounds = array<i64: 256, 128>}, {transform_indices = @transform_2, window_bounds = array<i64: 8, 128>}]} {
    %c0 = arith.constant 0 : index
    %c0_0 = arith.constant 0 : index
    %0 = vector.load %arg1[%c0, %c0_0] : memref<8x256xf32, #tpu.memory_space<vmem>>, vector<8x256xf32>
    %c0_1 = arith.constant 0 : index
    %c0_2 = arith.constant 0 : index
    %1 = vector.load %arg2[%c0_1, %c0_2] : memref<256x128xf32, #tpu.memory_space<vmem>>, vector<256x128xf32>
    %cst = arith.constant dense<0.000000e+00> : vector<8x128xf32>
    %2 = tpu.matmul %0, %1, %cst {dimension_numbers = #tpu.dot_dimension_numbers<[1], [0], [0], [1], [0, 0, 1, 1], [], []>} : vector<8x256xf32>, vector<256x128xf32>, vector<8x128xf32> -> vector<8x128xf32>
    %cst_3 = arith.constant 0.000000e+00 : f32
    %3 = vector.broadcast %cst_3 : f32 to vector<8x128xf32>
    %4 = arith.cmpf ogt, %2, %3 : vector<8x128xf32>
    %cst_4 = arith.constant 0.00999999977 : f32
    %5 = vector.broadcast %cst_4 : f32 to vector<8x128xf32>
    %6 = arith.mulf %5, %2 : vector<8x128xf32>
    %7 = arith.select %4, %2, %6 : vector<8x128xi1>, vector<8x128xf32>
    %c0_5 = arith.constant 0 : index
    %c0_6 = arith.constant 0 : index
    %8 = vector.load %arg3[%c0_5, %c0_6] : memref<8x128xf32, #tpu.memory_space<vmem>>, vector<8x128xf32>
    tpu.vector_store %arg3[%c0_5, %c0_6], %7 {strides = array<i32>} : memref<8x128xf32, #tpu.memory_space<vmem>>, vector<8x128xf32>,
    return
  }
  func.func @transform_0(%arg0: i32) -> (i32, i32) {
    %c0_i32 = arith.constant 0 : i32
    %c0_i32_0 = arith.constant 0 : i32
    return %arg0, %c0_i32 : i32, i32
  }
  func.func @transform_1(%arg0: i32) -> (i32, i32) {
    %c0_i32 = arith.constant 0 : i32
    %c0_i32_0 = arith.constant 0 : i32
    %c0_i32_1 = arith.constant 0 : i32
    return %c0_i32, %c0_i32_0 : i32, i32
  }
  func.func @transform_2(%arg0: i32) -> (i32, i32) {
    %c0_i32 = arith.constant 0 : i32
    %c0_i32_0 = arith.constant 0 : i32
    return %arg0, %c0_i32 : i32, i32
  }
}

</mosaic_0001>

<llo_original>
// kernel: tpu_custom_call.1
$region0: #{tpu_custom_call.1}
  #allocation0 [shape = 'u32[]', space=smem, size = 0x4, offset = 0x4, fixed_abs, tag = 'smem constant byte address 0x4 - core index']
  #allocation1 [shape = 'u32[144,128]{1,0:T(1,128)}', space=vmem, size = 0x12000, scoped, tag = 'internal scratch']
  %s0 = inlined_call_operand.hbm [shape: f32[8,256], index: 0, kind: input, shape index: {}]
  %s1 = inlined_call_operand.hbm [shape: f32[256,128], index: 1, kind: input, shape index: {}]
  %s2 = inlined_call_operand.hbm [shape: f32[8,128], index: 2, kind: output, shape index: {}]
  %s3 = sld [smem:[#allocation0]]
  $region26: #{tpu_custom_call.1} parent=0
    _
  %s5 = ssub.s32 1, %s3
  %s6 = scalar_select 0, %s5, %s3
  $region1: #{tpu_custom_call.1} parent=0
    #allocation2 [shape = 'u8[8192]{0}', space=vmem, size = 0x2000, scoped, tag = 'input window, operand 0, single buffered']
    #allocation3 [shape = 's32[1]{0}', space=sflag, size = 0x4, scoped, tag = 'scoped memory for tpu_custom_call.1']
    #allocation4 [shape = 's32[1]{0}', space=sflag, size = 0x4, scoped, tag = 'scoped memory for tpu_custom_call.1']
    #allocation5 [shape = 'u8[131072]{0}', space=vmem, size = 0x20000, scoped, tag = 'input window, operand 1, single buffered']
    #allocation6 [shape = 's32[1]{0}', space=sflag, size = 0x4, scoped, tag = 'scoped memory for tpu_custom_call.1']
    #allocation7 [shape = 'u8[4096]{0}', space=vmem, size = 0x1000, scoped, tag = 'output window, operand 0, single buffered']
    %7 = vsyncpa [#allocation3], 0
    %8 = vsyncpa [#allocation6], 0
    %9 = vsyncpa [#allocation4], 0
    // Predicated region
    $region2: #{tpu_custom_call.1} parent=1 // pred_check
      _
    $region3: #{tpu_custom_call.1} parent=1 // pred_check_branch
      %11 = sbr.rel (0) target = $region5
    $region4: #{tpu_custom_call.1} parent=1 // pred_region
      %s13 = ssub.s32 256, 256
      %14 = vsyncadd [#allocation3], %s13
      %s16 = sshll.u32 [#allocation2], 4
      %s17 = int_to_ptr.vmem [resolvable:$true] %s16
      %19 = dma.hbm_to_vmem [thread:$0]  %s0, 256, %s17, [#allocation3]
    $region5: #{tpu_custom_call.1} parent=1 // pred_fallthru
      _
    // Predicated region
    $region6: #{tpu_custom_call.1} parent=1 // pred_check
      _
    $region7: #{tpu_custom_call.1} parent=1 // pred_check_branch
      %21 = sbr.rel (0) target = $region9
    $region8: #{tpu_custom_call.1} parent=1 // pred_region
      %s23 = ssub.s32 4096, 4096
      %24 = vsyncadd [#allocation6], %s23
      %s25 = sshll.u32 [#allocation5], 4
      %s26 = int_to_ptr.vmem [resolvable:$true] %s25
      %31 = dma.hbm_to_vmem [thread:$0]  %s1, 4096, %s26, [#allocation6], 128, 128, 8
    $region9: #{tpu_custom_call.1} parent=1 // pred_fallthru
      _
    // Predicated region
    $region10: #{tpu_custom_call.1} parent=1 // pred_check
      _
    $region11: #{tpu_custom_call.1} parent=1 // pred_check_branch
      %33 = sbr.rel (0) target = $region13
    $region12: #{tpu_custom_call.1} parent=1 // pred_region
      %34 = dma.done [#allocation3], 256
    $region13: #{tpu_custom_call.1} parent=1 // pred_fallthru
      _
    // Predicated region
    $region14: #{tpu_custom_call.1} parent=1 // pred_check
      _
    $region15: #{tpu_custom_call.1} parent=1 // pred_check_branch
      %36 = sbr.rel (0) target = $region17
    $region16: #{tpu_custom_call.1} parent=1 // pred_region
      %37 = dma.done [#allocation6], 4096
    $region17: #{tpu_custom_call.1} parent=1 // pred_fallthru
      _
    %v38 = vld [vmem:[#allocation2] sm:$0xff]
    %v39 = vld [vmem:[#allocation2 + $0x8] sm:$0xff]
    %v40 = vld [vmem:[#allocation5] sm:$0xff]
    %v41 = vld [vmem:[#allocation5 + $0x8] sm:$0xff]
    %v42 = vld [vmem:[#allocation5 + $0x10] sm:$0xff]
    %v43 = vld [vmem:[#allocation5 + $0x18] sm:$0xff]
    %v44 = vld [vmem:[#allocation5 + $0x20] sm:$0xff]
    %v45 = vld [vmem:[#allocation5 + $0x28] sm:$0xff]
    %v46 = vld [vmem:[#allocation5 + $0x30] sm:$0xff]
    %v47 = vld [vmem:[#allocation5 + $0x38] sm:$0xff]
    %v48 = vld [vmem:[#allocation5 + $0x40] sm:$0xff]
    %v49 = vld [vmem:[#allocation5 + $0x48] sm:$0xff]
    %v50 = vld [vmem:[#allocation5 + $0x50] sm:$0xff]
    %v51 = vld [vmem:[#allocation5 + $0x58] sm:$0xff]
    %v52 = vld [vmem:[#allocation5 + $0x60] sm:$0xff]
    %v53 = vld [vmem:[#allocation5 + $0x68] sm:$0xff]
    %v54 = vld [vmem:[#allocation5 + $0x70] sm:$0xff]
    %v55 = vld [vmem:[#allocation5 + $0x78] sm:$0xff]
    %v56 = vld [vmem:[#allocation5 + $0x80] sm:$0xff]
    %v57 = vld [vmem:[#allocation5 + $0x88] sm:$0xff]
    %v58 = vld [vmem:[#allocation5 + $0x90] sm:$0xff]
    %v59 = vld [vmem:[#allocation5 + $0x98] sm:$0xff]
    %v60 = vld [vmem:[#allocation5 + $0xa0] sm:$0xff]
    %v61 = vld [vmem:[#allocation5 + $0xa8] sm:$0xff]
    %v62 = vld [vmem:[#allocation5 + $0xb0] sm:$0xff]
    %v63 = vld [vmem:[#allocation5 + $0xb8] sm:$0xff]
    %v64 = vld [vmem:[#allocation5 + $0xc0] sm:$0xff]
    %v65 = vld [vmem:[#allocation5 + $0xc8] sm:$0xff]
    %v66 = vld [vmem:[#allocation5 + $0xd0] sm:$0xff]
    %v67 = vld [vmem:[#allocation5 + $0xd8] sm:$0xff]
    %v68 = vld [vmem:[#allocation5 + $0xe0] sm:$0xff]
    %v69 = vld [vmem:[#allocation5 + $0xe8] sm:$0xff]
    %v70 = vld [vmem:[#allocation5 + $0xf0] sm:$0xff]
    %v71 = vld [vmem:[#allocation5 + $0xf8] sm:$0xff]
    %72 = vmatprep.subr.mxu0 0.0
    %73 = vmatpush1.msra.mxu0 %v40
    %74 = vmatprep.subr.mxu0 0.0
    %75 = vmatpush1.msra.mxu0 %v41
    %76 = vmatprep.subr.mxu0 0.0
    %77 = vmatpush1.msra.mxu0 %v42
    %78 = vmatprep.subr.mxu0 0.0
    %79 = vmatpush1.msra.mxu0 %v43
    %80 = vmatprep.subr.mxu0 0.0
    %81 = vmatpush1.msra.mxu0 %v44
    %82 = vmatprep.subr.mxu0 0.0
    %83 = vmatpush1.msra.mxu0 %v45
    %84 = vmatprep.subr.mxu0 0.0
    %85 = vmatpush1.msra.mxu0 %v46
    %86 = vmatprep.subr.mxu0 0.0
    %87 = vmatpush1.msra.mxu0 %v47
    %88 = vmatprep.subr.mxu0 0.0
    %89 = vmatpush1.msra.mxu0 %v48
    %90 = vmatprep.subr.mxu0 0.0
    %91 = vmatpush1.msra.mxu0 %v49
    %92 = vmatprep.subr.mxu0 0.0
    %93 = vmatpush1.msra.mxu0 %v50
    %94 = vmatprep.subr.mxu0 0.0
    %95 = vmatpush1.msra.mxu0 %v51
    %96 = vmatprep.subr.mxu0 0.0
    %97 = vmatpush1.msra.mxu0 %v52
    %98 = vmatprep.subr.mxu0 0.0
    %99 = vmatpush1.msra.mxu0 %v53
    %100 = vmatprep.subr.mxu0 0.0
    %101 = vmatpush1.msra.mxu0 %v54
    %102 = vmatprep.subr.mxu0 0.0
    %103 = vmatpush1.msra.mxu0 %v55
    %104 = vmatprep.subr.mxu0 0.0
    %105 = vmatpush1.msra.mxu0 %v56
    %106 = vmatprep.subr.mxu0 0.0
    %107 = vmatpush1.msra.mxu0 %v57
    %108 = vmatprep.subr.mxu0 0.0
    %109 = vmatpush1.msra.mxu0 %v58
    %110 = vmatprep.subr.mxu0 0.0
    %111 = vmatpush1.msra.mxu0 %v59
    %112 = vmatprep.subr.mxu0 0.0
    %113 = vmatpush1.msra.mxu0 %v60
    %114 = vmatprep.subr.mxu0 0.0
    %115 = vmatpush1.msra.mxu0 %v61
    %116 = vmatprep.subr.mxu0 0.0
    %117 = vmatpush1.msra.mxu0 %v62
    %118 = vmatprep.subr.mxu0 0.0
    %119 = vmatpush1.msra.mxu0 %v63
    %120 = vmatprep.subr.mxu0 0.0
    %121 = vmatpush1.msra.mxu0 %v64
    %122 = vmatprep.subr.mxu0 0.0
    %123 = vmatpush1.msra.mxu0 %v65
    %124 = vmatprep.subr.mxu0 0.0
    %125 = vmatpush1.msra.mxu0 %v66
    %126 = vmatprep.subr.mxu0 0.0
    %127 = vmatpush1.msra.mxu0 %v67
    %128 = vmatprep.subr.mxu0 0.0
    %129 = vmatpush1.msra.mxu0 %v68
    %130 = vmatprep.subr.mxu0 0.0
    %131 = vmatpush1.msra.mxu0 %v69
    %132 = vmatprep.subr.mxu0 0.0
    %133 = vmatpush1.msra.mxu0 %v70
    %134 = vmatprep.subr.mxu0 0.0
    %135 = vmatpush1.msra.mxu0 %v71
    %136 = vmatprep.mubr.f32.mxu0 %v39
    %137 = vmatmul.mubr.f32.gmra.mrb[0].mxu0 %v38
    %v138 = vpop.f32.mrb[0].mxu0
    %v139 = vadd.f32 0.0, %v138
    %v140 = vpop.f32.mrb[0].mxu0
    %141 = vdwg.mxu0
    %vm142 = vcmp.gt.f32.partialorder %v139, 0.0
    %v143 = vmul.f32 %v139, 0.01
    %v144 = vsel %vm142, %v139, %v143
    %145 = vst [vmem:[#allocation7] sm:$0xff] %v144
    // Predicated region
    $region18: #{tpu_custom_call.1} parent=1 // pred_check
      _
    $region19: #{tpu_custom_call.1} parent=1 // pred_check_branch
      %147 = sbr.rel (0) target = $region21
    $region20: #{tpu_custom_call.1} parent=1 // pred_region
      %s149 = ssub.s32 128, 128
      %150 = vsyncadd [#allocation4], %s149
      %s152 = sshll.u32 [#allocation7], 4
      %s153 = int_to_ptr.vmem [resolvable:$true] %s152
      %155 = dma.vmem_to_hbm [thread:$0]  %s153, 128, %s2, [#allocation4]
    $region21: #{tpu_custom_call.1} parent=1 // pred_fallthru
      _
    // Predicated region
    $region22: #{tpu_custom_call.1} parent=1 // pred_check
      _
    $region23: #{tpu_custom_call.1} parent=1 // pred_check_branch
      %157 = sbr.rel (0) target = $region25
    $region24: #{tpu_custom_call.1} parent=1 // pred_region
      %158 = dma.done [#allocation4], 128
    $region25: #{tpu_custom_call.1} parent=1 // pred_fallthru
      _
    %159 = vsyncpa [#allocation3], 1
    %160 = vsyncpa [#allocation6], 1
    %161 = vsyncpa [#allocation4], 1

</llo_original>
